<compile_context>
chip_gen: v7x
topology: tpu7x:2x2x1
jax: 0.10.0
libtpu: 0.0.40
codegen_flags: <defaults>
</compile_context>

<pallas_src>
import functools

import jax
import jax.numpy as jnp
import numpy as np
from jax.experimental import pallas as pl
from jax.experimental.pallas import tpu as pltpu


def ldam_kernel(emb_ref, w_ref, scale_ref, phi_ref, out_ref, *, s, tb, tc):
    """One grid step: `tb` batch rows x `tc` class columns.

    emb_ref   : (tb, E)  bf16   embeddings tile
    w_ref     : (E, tc)  bf16   raw (un-normalized) weight tile
    scale_ref : (1, tc)  f32    s / ||w[:, c]||_2  (precomputed, s folded in)
    phi_ref   : (tb, 1)  f32    s * phi[i, label[i]] (precomputed per row)
    out_ref   : (tb, tc) f32
    """
    bi = pl.program_id(0)
    cj = pl.program_id(1)

    # bf16 MXU matmul with f32 accumulation on the raw weight; normalization is
    # applied post-matmul as a single (1, tc) column scale (s already folded in).
    z = jnp.dot(emb_ref[...], w_ref[...],
                preferred_element_type=jnp.float32)                    # (tb, tc) f32
    # clip(cos, -1, 1) * s == clip(cos * s, -s, s)
    cos_s = jnp.clip(z * scale_ref[...], -s, s)                        # (tb, tc) == s*cos

    row0 = bi * tb                                                     # first global row
    col0 = cj * tc                                                     # first global column

    # The diagonal out[i, i] for this batch tile lives in columns
    # [row0, row0 + tb); only C tiles intersecting that range need the select.
    has_diag = jnp.logical_and(row0 < col0 + tc, col0 < row0 + tb)

    @pl.when(has_diag)
    def _():
        col_ids = col0 + jax.lax.broadcasted_iota(jnp.int32, (tb, tc), 1)
        row_ids = row0 + jax.lax.broadcasted_iota(jnp.int32, (tb, tc), 0)
        out = jnp.where(col_ids == row_ids, phi_ref[...], cos_s)
        out_ref[...] = out.astype(out_ref.dtype)

    @pl.when(jnp.logical_not(has_diag))
    def _():
        out_ref[...] = cos_s.astype(out_ref.dtype)


def _pick_tb(B):
    # Prefer MXU-sized row tiles (256 on v6e/v7x, 128 on v5e), always a multiple
    # of 16 for bf16 sublane packing; fall back to the full batch for tiny demos.
    for t in (256, 128, 64, 32, 16):
        if B % t == 0:
            return t
    return B


def _pick_tc(C, E, tb, vmem_cap):
    # Largest power-of-two multiple of 128 that divides C and keeps the
    # double-buffered weight/output/scale/embedding tiles inside ~half of VMEM.
    if C % 128 != 0:
        return C  # irregular/small C: single full-extent tile
    budget = vmem_cap // 2
    for tc in (8192, 4096, 2048, 1024, 512, 256, 128):
        if C % tc:
            continue
        need = (2 * E * tc * 2          # bf16 weight tile, double buffered
                + 2 * tb * tc * 4       # f32 output tile, double buffered
                + 2 * tc * 4            # f32 column scale
                + 2 * tb * E * 2)       # bf16 embeddings tile
        if need <= budget:
            return tc
    return 128


def ldam_forward(embeddings, label, age, weight, m_list, *, s=64.0, tb=None, tc=None):
    B, E = embeddings.shape
    E2, C = weight.shape
    assert E == E2 and B <= C
    s = float(s)

    try:
        vmem_cap = int(pltpu.get_tpu_info().vmem_capacity_bytes)
    except Exception:
        vmem_cap = 64 * 1024 * 1024      # conservative (v7x per-TC) fallback

    if tb is None:
        tb = _pick_tb(B)
    assert B % tb == 0 and (tb % 8 == 0 or tb == B)
    if tc is None:
        tc = _pick_tc(C, E, tb, vmem_cap)
    assert C % tc == 0 and (tc % 128 == 0 or tc == C)

    # bf16 matmul operands (halves HBM/VMEM traffic, ~2x MXU rate); all
    # post-matmul math stays in f32.
    emb_bf = embeddings.astype(jnp.bfloat16)
    w_bf = weight.astype(jnp.bfloat16)
    label = label.reshape(-1).astype(jnp.int32)
    age = age.reshape(-1).astype(jnp.int32)
    m_list = m_list.astype(jnp.float32)

    # ---- host-side (plain JAX) precompute: tiny one-time work -------------
    # column-norm reciprocal of the f32 weight, with s folded in -> one (1, C) scale
    wf = weight.astype(jnp.float32)
    col_inv = jax.lax.rsqrt(jnp.sum(wf * wf, axis=0))                  # (C,)
    col_scale = (col_inv * s).reshape(1, C).astype(jnp.float32)

    # per-row diagonal value: s * phi[i, label[i]]  (gathered B-row dot, bf16
    # operands / f32 accumulation to match the kernel's MXU numerics)
    w_lab = jnp.take(w_bf, label, axis=1)                              # (E, B)
    z_lab = jnp.einsum("be,eb->b", emb_bf, w_lab,
                       preferred_element_type=jnp.float32)             # (B,)
    cos_s_lab = jnp.clip(z_lab * col_inv[label] * s, -s, s)
    phi_s = (cos_s_lab - m_list[age] * s).reshape(B, 1).astype(jnp.float32)

    # ---- main kernel: streamed matmul + scale + clip + gated diag select ---
    # TODO(synk): emit bf16 output (keeping diag f32) if downstream consumers
    # accept it — halves the dominant (B, C) write-back traffic.
    return pl.pallas_call(
        functools.partial(ldam_kernel, s=s, tb=tb, tc=tc),
        out_shape=jax.ShapeDtypeStruct((B, C), jnp.float32),
        grid_spec=pl.GridSpec(
            grid=(B // tb, C // tc),
            in_specs=[
                pl.BlockSpec((tb, E), lambda i, j: (i, 0)),   # embeddings tile (bf16)
                pl.BlockSpec((E, tc), lambda i, j: (0, j)),   # streamed raw weight tile (bf16)
                pl.BlockSpec((1, tc), lambda i, j: (0, j)),   # s / ||w[:,c]|| column scale
                pl.BlockSpec((tb, 1), lambda i, j: (i, 0)),   # s*phi[i,label[i]] per row
            ],
            out_specs=pl.BlockSpec((tb, tc), lambda i, j: (i, j)),
        ),
        compiler_params=pltpu.CompilerParams(
            dimension_semantics=("parallel", "arbitrary"),    # batch across TCs, C streamed
            vmem_limit_bytes=int(vmem_cap * 3 // 4),
        ),
    )(emb_bf, w_bf, col_scale, phi_s)


if __name__ == "__main__":
    # small, TPU-tile-friendly shapes consistent with the module
    B, E, C = 8, 32, 128          # batch, embedding_size, classnum
    max_m, s = 1.0, 64.0
    cls_num_list = np.array([10, 20, 50, 100, 200, 500, 30, 80], dtype=np.float64)
    M = cls_num_list.shape[0]

    key = jax.random.PRNGKey(0)
    k1, k2, k3, k4 = jax.random.split(key, 4)

    # deterministic parameter init mirroring:
    #   kernel.uniform_(-1, 1).renorm_(2, 1, 1e-5).mul_(1e5)
    w = jax.random.uniform(k1, (E, C), minval=-1.0, maxval=1.0, dtype=jnp.float32)
    col_norm = jnp.sqrt(jnp.sum(w * w, axis=0, keepdims=True))
    factor = jnp.where(col_norm > 1e-5, 1e-5 / col_norm, 1.0) * 1e5
    w = w * factor

    m_list = 1.0 / np.sqrt(np.sqrt(cls_num_list))
    m_list = m_list * (max_m / np.max(m_list))
    m_list = jnp.asarray(m_list, dtype=jnp.float32)

    emb = jax.random.normal(k2, (B, E), dtype=jnp.float32)
    emb = emb / jnp.linalg.norm(emb, axis=1, keepdims=True)
    label = jax.random.randint(k3, (B,), 0, C, dtype=jnp.int32)
    age = jax.random.randint(k4, (B,), 0, M, dtype=jnp.int32)

    out = jax.block_until_ready(ldam_forward(emb, label, age, w, m_list, s=s))

    idx = jnp.arange(B)

    # (a) tight reference: same module math evaluated with the same bf16-rounded
    #     matmul operands and the same precomputed diagonal path as the kernel.
    emb_bf = emb.astype(jnp.bfloat16)
    w_bf = w.astype(jnp.bfloat16)
    col_inv = jax.lax.rsqrt(jnp.sum(w * w, axis=0))
    z_ref = jnp.dot(emb_bf, w_bf, preferred_element_type=jnp.float32)
    cos_s_ref = jnp.clip(z_ref * col_inv[None, :] * s, -s, s)
    z_lab = jnp.einsum("be,eb->b", emb_bf, jnp.take(w_bf, label, axis=1),
                       preferred_element_type=jnp.float32)
    phi_s_lab = jnp.clip(z_lab * col_inv[label] * s, -s, s) - m_list[age] * s
    ref_bf = cos_s_ref.at[idx, idx].set(phi_s_lab)
    np.testing.assert_allclose(np.asarray(out), np.asarray(ref_bf), rtol=1e-3, atol=1e-3)

    # (b) loose sanity check vs. the pure-f32 PyTorch-module math (bf16 MXU drift only)
    w_norm_ref = w / jnp.linalg.norm(w, axis=0, keepdims=True)
    cos_ref = jnp.clip(emb @ w_norm_ref, -1.0, 1.0)
    phi_ref = cos_ref - m_list[age][:, None]
    ref_f32 = cos_ref.at[idx, idx].set(phi_ref[idx, label]) * s
    np.testing.assert_allclose(np.asarray(out), np.asarray(ref_f32), rtol=3e-2, atol=3e-1)

    print("KERNEL_OK")
</pallas_src>

<mosaic_0001>
module attributes {stable_mosaic.version = 11 : i64} {
  func.func @ldam_kernel(%arg0: i32, %arg1: i32, %arg2: memref<8x32xbf16, #tpu.memory_space<vmem>>, %arg3: memref<32x128xbf16, #tpu.memory_space<vmem>>, %arg4: memref<1x128xf32, #tpu.memory_space<vmem>>, %arg5: memref<8x1xf32, #tpu.memory_space<vmem>>, %arg6: memref<8x128xf32, #tpu.memory_space<vmem>>) attributes {dimension_semantics = [#tpu.dimension_semantics<parallel>, #tpu.dimension_semantics<arbitrary>], iteration_bounds = array<i64: 1, 1>, scalar_prefetch = 0 : i64, scratch_operands = 0 : i64, tpu.core_type = #tpu.core_type<tc>, window_params = [{transform_indices = @transform_0, window_bounds = array<i64: 8, 32>}, {transform_indices = @transform_1, window_bounds = array<i64: 32, 128>}, {transform_indices = @transform_2, window_bounds = array<i64: 1, 128>}, {transform_indices = @transform_3, window_bounds = array<i64: 8, 1>}, {transform_indices = @transform_4, window_bounds = array<i64: 8, 128>}]} {
    %c0 = arith.constant 0 : index
    %c0_0 = arith.constant 0 : index
    %0 = vector.load %arg2[%c0, %c0_0] : memref<8x32xbf16, #tpu.memory_space<vmem>>, vector<8x32xbf16>
    %c0_1 = arith.constant 0 : index
    %c0_2 = arith.constant 0 : index
    %1 = vector.load %arg3[%c0_1, %c0_2] : memref<32x128xbf16, #tpu.memory_space<vmem>>, vector<32x128xbf16>
    %cst = arith.constant dense<0.000000e+00> : vector<8x128xf32>
    %2 = tpu.matmul %0, %1, %cst {dimension_numbers = #tpu.dot_dimension_numbers<[1], [0], [0], [1], [0, 0, 1, 1], [], []>} : vector<8x32xbf16>, vector<32x128xbf16>, vector<8x128xf32> -> vector<8x128xf32>
    %c0_3 = arith.constant 0 : index
    %c0_4 = arith.constant 0 : index
    %3 = vector.load %arg4[%c0_3, %c0_4] : memref<1x128xf32, #tpu.memory_space<vmem>>, vector<1x128xf32>
    %4 = vector.broadcast %3 : vector<1x128xf32> to vector<8x128xf32>
    %5 = arith.mulf %2, %4 : vector<8x128xf32>
    %cst_5 = arith.constant -6.400000e+01 : f32
    %cst_6 = arith.constant 6.400000e+01 : f32
    %6 = vector.broadcast %cst_5 : f32 to vector<8x128xf32>
    %7 = arith.maximumf %6, %5 : vector<8x128xf32>
    %8 = vector.broadcast %cst_6 : f32 to vector<8x128xf32>
    %9 = arith.minimumf %8, %7 : vector<8x128xf32>
    %c8_i32 = arith.constant 8 : i32
    %10 = arith.muli %arg0, %c8_i32 : i32
    %c128_i32 = arith.constant 128 : i32
    %11 = arith.muli %arg1, %c128_i32 : i32
    %c128_i32_7 = arith.constant 128 : i32
    %12 = arith.addi %11, %c128_i32_7 : i32
    %13 = arith.cmpi slt, %10, %12 : i32
    %c8_i32_8 = arith.constant 8 : i32
    %14 = arith.addi %10, %c8_i32_8 : i32
    %15 = arith.cmpi slt, %11, %14 : i32
    %16 = arith.andi %13, %15 : i1
    %17 = arith.extui %16 : i1 to i32
    %c0_i32 = arith.constant 0 : i32
    %18 = arith.cmpi ne, %17, %c0_i32 : i32
    scf.if %18 {
      %22 = tpu.iota {dimensions = array<i32: 1>} : vector<8x128xi32>
      %23 = vector.broadcast %11 : i32 to vector<8x128xi32>
      %24 = arith.addi %23, %22 : vector<8x128xi32>
      %25 = tpu.iota {dimensions = array<i32: 0>} : vector<8x128xi32>
      %26 = vector.broadcast %10 : i32 to vector<8x128xi32>
      %27 = arith.addi %26, %25 : vector<8x128xi32>
      %28 = arith.cmpi eq, %24, %27 : vector<8x128xi32>
      %c0_10 = arith.constant 0 : index
      %c0_11 = arith.constant 0 : index
      %29 = vector.load %arg5[%c0_10, %c0_11] : memref<8x1xf32, #tpu.memory_space<vmem>>, vector<8x1xf32>
      %30 = vector.shape_cast %29 : vector<8x1xf32> to vector<8x1xf32>
      %31 = vector.broadcast %30 : vector<8x1xf32> to vector<8x128xf32>
      %32 = arith.select %28, %31, %9 : vector<8x128xi1>, vector<8x128xf32>
      %c0_12 = arith.constant 0 : index
      %c0_13 = arith.constant 0 : index
      %33 = vector.load %arg6[%c0_12, %c0_13] : memref<8x128xf32, #tpu.memory_space<vmem>>, vector<8x128xf32>
      tpu.vector_store %arg6[%c0_12, %c0_13], %32 {strides = array<i32>} : memref<8x128xf32, #tpu.memory_space<vmem>>, vector<8x128xf32>,
    } else {
    }
    %true = arith.constant true
    %19 = arith.xori %16, %true : i1
    %20 = arith.extui %19 : i1 to i32
    %c0_i32_9 = arith.constant 0 : i32
    %21 = arith.cmpi ne, %20, %c0_i32_9 : i32
    scf.if %21 {
      %c0_10 = arith.constant 0 : index
      %c0_11 = arith.constant 0 : index
      %22 = vector.load %arg6[%c0_10, %c0_11] : memref<8x128xf32, #tpu.memory_space<vmem>>, vector<8x128xf32>
      tpu.vector_store %arg6[%c0_10, %c0_11], %9 {strides = array<i32>} : memref<8x128xf32, #tpu.memory_space<vmem>>, vector<8x128xf32>,
    } else {
    }
    return
  }
  func.func @transform_0(%arg0: i32, %arg1: i32) -> (i32, i32) {
    %c0_i32 = arith.constant 0 : i32
    %c0_i32_0 = arith.constant 0 : i32
    return %arg0, %c0_i32 : i32, i32
  }
  func.func @transform_1(%arg0: i32, %arg1: i32) -> (i32, i32) {
    %c0_i32 = arith.constant 0 : i32
    %c0_i32_0 = arith.constant 0 : i32
    return %c0_i32, %arg1 : i32, i32
  }
  func.func @transform_2(%arg0: i32, %arg1: i32) -> (i32, i32) {
    %c0_i32 = arith.constant 0 : i32
    %c0_i32_0 = arith.constant 0 : i32
    return %c0_i32, %arg1 : i32, i32
  }
  func.func @transform_3(%arg0: i32, %arg1: i32) -> (i32, i32) {
    %c0_i32 = arith.constant 0 : i32
    %c0_i32_0 = arith.constant 0 : i32
    return %arg0, %c0_i32 : i32, i32
  }
  func.func @transform_4(%arg0: i32, %arg1: i32) -> (i32, i32) {
    %c0_i32 = arith.constant 0 : i32
    return %arg0, %arg1 : i32, i32
  }
}

</mosaic_0001>

<llo_original>
// kernel: tpu_custom_call.1
$region0: #{tpu_custom_call.1}
  #allocation0 [shape = 'u32[]', space=smem, size = 0x4, offset = 0x4, fixed_abs, tag = 'smem constant byte address 0x4 - core index']
  #allocation1 [shape = 'u32[144,128]{1,0:T(1,128)}', space=vmem, size = 0x12000, scoped, tag = 'internal scratch']
  %s0 = inlined_call_operand.vmem [shape: bf16[8,32], index: 0, kind: input, shape index: {}]
  %s1 = inlined_call_operand.hbm [shape: bf16[32,128], index: 1, kind: input, shape index: {}]
  %s2 = inlined_call_operand.vmem [shape: f32[1,128], index: 2, kind: input, shape index: {}]
  %s3 = inlined_call_operand.vmem [shape: f32[8,1], index: 3, kind: input, shape index: {}]
  %s4 = inlined_call_operand.hbm [shape: f32[8,128], index: 4, kind: output, shape index: {}]
  %s5 = sld [smem:[#allocation0]]
  $region38: #{tpu_custom_call.1} parent=0
    _
  %s7 = ssub.s32 1, %s5
  %s8 = scalar_select 0, %s7, %s5
  $region1: #{tpu_custom_call.1} parent=0
    #allocation2 [shape = 'u8[8192]{0}', space=vmem, size = 0x2000, scoped, tag = 'input window, operand 1, single buffered']
    #allocation3 [shape = 's32[1]{0}', space=sflag, size = 0x4, scoped, tag = 'scoped memory for tpu_custom_call.1']
    #allocation4 [shape = 's32[1]{0}', space=sflag, size = 0x4, scoped, tag = 'scoped memory for tpu_custom_call.1']
    #allocation5 [shape = 'u8[4096]{0}', space=vmem, size = 0x1000, scoped, tag = 'output window, operand 0, single buffered']
    %9 = vsyncpa [#allocation3], 0
    %10 = vsyncpa [#allocation4], 0
    // Predicated region
    $region2: #{tpu_custom_call.1} parent=1 // pred_check
      _
    $region3: #{tpu_custom_call.1} parent=1 // pred_check_branch
      %12 = sbr.rel (0) target = $region5
    $region4: #{tpu_custom_call.1} parent=1 // pred_region
      _
    $region5: #{tpu_custom_call.1} parent=1 // pred_fallthru
      _
    // Predicated region
    $region6: #{tpu_custom_call.1} parent=1 // pred_check
      _
    $region7: #{tpu_custom_call.1} parent=1 // pred_check_branch
      %14 = sbr.rel (0) target = $region9
    $region8: #{tpu_custom_call.1} parent=1 // pred_region
      %s16 = ssub.s32 256, 256
      %17 = vsyncadd [#allocation3], %s16
      %s18 = sshll.u32 [#allocation2], 4
      %s19 = int_to_ptr.vmem [resolvable:$true] %s18
      %24 = dma.hbm_to_vmem [thread:$0]  %s1, 256, %s19, [#allocation3], 64, 64, 4
    $region9: #{tpu_custom_call.1} parent=1 // pred_fallthru
      _
    // Predicated region
    $region10: #{tpu_custom_call.1} parent=1 // pred_check
      _
    $region11: #{tpu_custom_call.1} parent=1 // pred_check_branch
      %26 = sbr.rel (0) target = $region13
    $region12: #{tpu_custom_call.1} parent=1 // pred_region
      _
    $region13: #{tpu_custom_call.1} parent=1 // pred_fallthru
      _
    // Predicated region
    $region14: #{tpu_custom_call.1} parent=1 // pred_check
      _
    $region15: #{tpu_custom_call.1} parent=1 // pred_check_branch
      %28 = sbr.rel (0) target = $region17
    $region16: #{tpu_custom_call.1} parent=1 // pred_region
      _
    $region17: #{tpu_custom_call.1} parent=1 // pred_fallthru
      _
    // Predicated region
    $region18: #{tpu_custom_call.1} parent=1 // pred_check
      _
    $region19: #{tpu_custom_call.1} parent=1 // pred_check_branch
      %30 = sbr.rel (0) target = $region21
    $region20: #{tpu_custom_call.1} parent=1 // pred_region
      %31 = dma.done [#allocation3], 256
    $region21: #{tpu_custom_call.1} parent=1 // pred_fallthru
      _
    %v33 = vld [vmem:[%s0] sm:$0xf]
    %v34 = vld [vmem:[#allocation2] sm:$0xf]
    %v35 = vld [vmem:[#allocation2 + $0x4] sm:$0xf]
    %v36 = vld [vmem:[#allocation2 + $0x8] sm:$0xf]
    %v37 = vld [vmem:[#allocation2 + $0xc] sm:$0xf]
    %v42 = vunpack.c.l.b16 %v34
    %v43 = vunpack.c.l.b16 %v35
    %v44 = vunpack.c.l.b16 %v36
    %v45 = vunpack.c.l.b16 %v37
    %v46 = vpack.c.b16 %v43, %v42
    %v47 = vpack.c.b16 %v45, %v44
    %vm50 = vcmask 261120
    %v52 = vsel %vm50, %v33, 0
    %54 = vmatprep.subr.bf16.mxu0 0
    %55 = vmatpush1.bf16.msra.mxu0 %v46
    %56 = vmatprep.subr.bf16.mxu0 0
    %57 = vmatpush1.bf16.msra.mxu0 %v47
    %58 = vmatprep.subr.bf16.mxu0 0
    %59 = vmatpush1.bf16.msra.mxu0 0
    %60 = vmatprep.subr.bf16.mxu0 0
    %61 = vmatpush1.bf16.msra.mxu0 0
    %62 = vmatprep.subr.bf16.mxu0 0
    %63 = vmatpush1.bf16.msra.mxu0 0
    %64 = vmatprep.subr.bf16.mxu0 0
    %65 = vmatpush1.bf16.msra.mxu0 0
    %66 = vmatprep.subr.bf16.mxu0 0
    %67 = vmatpush1.bf16.msra.mxu0 0
    %68 = vmatprep.subr.bf16.mxu0 0
    %69 = vmatpush1.bf16.msra.mxu0 0
    %70 = vmatprep.subr.bf16.mxu0 0
    %71 = vmatpush1.bf16.msra.mxu0 0
    %72 = vmatprep.subr.bf16.mxu0 0
    %73 = vmatpush1.bf16.msra.mxu0 0
    %74 = vmatprep.subr.bf16.mxu0 0
    %75 = vmatpush1.bf16.msra.mxu0 0
    %76 = vmatprep.subr.bf16.mxu0 0
    %77 = vmatpush1.bf16.msra.mxu0 0
    %78 = vmatprep.subr.bf16.mxu0 0
    %79 = vmatpush1.bf16.msra.mxu0 0
    %80 = vmatprep.subr.bf16.mxu0 0
    %81 = vmatpush1.bf16.msra.mxu0 0
    %82 = vmatprep.subr.bf16.mxu0 0
    %83 = vmatpush1.bf16.msra.mxu0 0
    %84 = vmatprep.subr.bf16.mxu0 0
    %85 = vmatpush1.bf16.msra.mxu0 0
    %86 = vmatprep.mubr.bf16.mxu0 0
    %87 = vmatmul.mubr.bf16.gmra.mrb[0].mxu0 %v52
    %v88 = vpop.f32.mrb[0].mxu0
    %v89 = vadd.f32 0.0, %v88
    %v90 = vpop.f32.mrb[0].mxu0
    %v91 = vpop.f32.mrb[0].mxu0
    %v92 = vpop.f32.mrb[0].mxu0
    %93 = vdwg.mxu0
    %v94 = vld [vmem:[%s2] sm:$0x1]
    %v96 = vlaneseq
    %v97 = vshrl.u32 %v96, 7
    %v98 = vsub.s32 0, %v97
    %v99 = vrot.slane %v94, %v98
    %v101 = vmul.f32 %v89, %v99
    %v102 = vmax.f32 %v101, -64.0
    %v103 = vmin.f32 %v102, 64.0
    %s104 = smul.u32 0, 8
    %s105 = smul.u32 0, 128
    %s106 = sadd.s32 %s105, 128
    %p107 = scmp.lt.s32.totalorder %s104, %s106
    %s108 = sadd.s32 %s104, 8
    %p109 = scmp.lt.s32.totalorder %s105, %s108
    %p110 = pnand %p107, %p109
    %p111 = pneg %p110
    // Predicated region
    $region22: #{tpu_custom_call.1} parent=1 // pred_check
      _
    $region23: #{tpu_custom_call.1} parent=1 // pred_check_branch
      %113 = sbr.rel (%p110) target = $region25
    $region24: #{tpu_custom_call.1} parent=1 // pred_region
      %v114 = vlaneseq
      %v115 = vand.u32 %v114, 127
      %v116 = vstv %s105
      %v117 = vadd.s32 %v116, %v115
      %v118 = vlaneseq
      %v119 = vshrl.u32 %v118, 7
      %v120 = vstv %s104
      %v121 = vadd.s32 %v120, %v119
      %vm122 = vcmp.eq.s32.totalorder %v117, %v121
      %v123 = vld [vmem:[%s3] sm:$0xff]
      %125 = vset.pattern.permute.xlu0 0
      %126 = vperm.xlu0 %125, %v123
      %v127 = vpop.permute.xlu0 %126
      %v129 = vsel %vm122, %v127, %v103
      %130 = vst [vmem:[#allocation5] sm:$0xff] %v129
    $region25: #{tpu_custom_call.1} parent=1 // pred_fallthru
      _
    %p131 = pneg %p111
    // Predicated region
    $region26: #{tpu_custom_call.1} parent=1 // pred_check
      _
    $region27: #{tpu_custom_call.1} parent=1 // pred_check_branch
      %133 = sbr.rel (%p111) target = $region29
    $region28: #{tpu_custom_call.1} parent=1 // pred_region
      %134 = vst [vmem:[#allocation5] sm:$0xff] %v103
    $region29: #{tpu_custom_call.1} parent=1 // pred_fallthru
      _
    // Predicated region
    $region30: #{tpu_custom_call.1} parent=1 // pred_check
      _
    $region31: #{tpu_custom_call.1} parent=1 // pred_check_branch
      %136 = sbr.rel (0) target = $region33
    $region32: #{tpu_custom_call.1} parent=1 // pred_region
      %s138 = ssub.s32 128, 128
      %139 = vsyncadd [#allocation4], %s138
      %s141 = sshll.u32 [#allocation5], 4
      %s142 = int_to_ptr.vmem [resolvable:$true] %s141
      %144 = dma.vmem_to_hbm [thread:$0]  %s142, 128, %s4, [#allocation4]
    $region33: #{tpu_custom_call.1} parent=1 // pred_fallthru
      _
    // Predicated region
    $region34: #{tpu_custom_call.1} parent=1 // pred_check
      _
    $region35: #{tpu_custom_call.1} parent=1 // pred_check_branch
      %146 = sbr.rel (0) target = $region37
    $region36: #{tpu_custom_call.1} parent=1 // pred_region
      %147 = dma.done [#allocation4], 128
    $region37: #{tpu_custom_call.1} parent=1 // pred_fallthru
      _
    %148 = vsyncpa [#allocation3], 1
    %149 = vsyncpa [#allocation4], 1

</llo_original>
